<compile_context>
chip_gen: v6e
topology: v6e:2x2x1
jax: 0.10.0
libtpu: 0.0.40
codegen_flags: <defaults>
</compile_context>

<pallas_src>
import functools

import jax
import jax.numpy as jnp
from jax import lax
from jax.experimental import pallas as pl
from jax.experimental.pallas import tpu as pltpu


def _make_siren_kernel(w0, is_last, has_freq, has_phase):
    def kernel(*refs):
        # refs: x, w, b, [freq], [phase], out
        x_ref, w_ref, b_ref = refs[0], refs[1], refs[2]
        idx = 3
        f_ref = p_ref = None
        if has_freq:
            f_ref = refs[idx]
            idx += 1
        if has_phase:
            p_ref = refs[idx]
            idx += 1
        o_ref = refs[idx]

        # x: (TM, in_f), w: (out_f, in_f) -> contract over in_f on the MXU.
        y = lax.dot_general(
            x_ref[...], w_ref[...],
            dimension_numbers=(((1,), (1,)), ((), ())),
            preferred_element_type=jnp.float32)
        y = y + b_ref[...]                      # bias broadcast over rows
        if has_freq:
            y = f_ref[...] * y                  # (TM,out_f) or (1,out_f) bcast
        if has_phase:
            y = y + p_ref[...]
        if not is_last:
            y = jnp.sin(w0 * y)                 # single VPU mul feeding EUP sin
        o_ref[...] = y.astype(o_ref.dtype)

    return kernel


def _round_up(a, b):
    return (a + b - 1) // b * b


def siren_layer(x, weight, bias, *, w0=30.0, is_last=False,
                cond_freq=None, cond_phase=None, tile_m=512):
    """Pallas implementation of SirenLayer.forward.

    x:      (M, in_f) float32
    weight: (out_f, in_f)  -- PyTorch nn.Linear layout (no transpose needed)
    bias:   (out_f,)
    cond_freq / cond_phase: None, or broadcastable to (M, out_f)
    """
    x = jnp.asarray(x, jnp.float32)
    weight = jnp.asarray(weight, jnp.float32)
    bias = jnp.asarray(bias, jnp.float32)

    M, in_f = x.shape
    out_f = weight.shape[0]

    # Row tile: sublane axis of the blocks must be a multiple of 8 (or the full
    # extent).  Pad M up to a multiple of TM; padded rows are sliced off below.
    TM = min(int(tile_m), _round_up(M, 8))
    M_pad = _round_up(M, TM)
    if M_pad != M:
        x = jnp.pad(x, ((0, M_pad - M), (0, 0)))
    grid = (M_pad // TM,)

    b2 = bias.reshape(1, out_f)

    in_arrays = [x, weight, b2]
    in_specs = [
        pl.BlockSpec((TM, in_f), lambda i: (i, 0)),
        pl.BlockSpec((out_f, in_f), lambda i: (0, 0)),   # weight resident
        pl.BlockSpec((1, out_f), lambda i: (0, 0)),      # bias resident
    ]

    def prep_cond(c):
        c = jnp.asarray(c, jnp.float32)
        if c.ndim == 0:
            c = c.reshape(1, 1)
        elif c.ndim == 1:
            c = c.reshape(1, -1)
        if c.shape[0] == 1:
            # Row-broadcast conditional: keep it small, broadcast in-kernel.
            c = jnp.broadcast_to(c, (1, out_f))
            return c, pl.BlockSpec((1, out_f), lambda i: (0, 0))
        # Per-row conditional: tile along with the output.
        c = jnp.broadcast_to(c, (M, out_f))
        if M_pad != M:
            c = jnp.pad(c, ((0, M_pad - M), (0, 0)))
        return c, pl.BlockSpec((TM, out_f), lambda i: (i, 0))

    has_freq = cond_freq is not None
    has_phase = cond_phase is not None
    if has_freq:
        arr, spec = prep_cond(cond_freq)
        in_arrays.append(arr)
        in_specs.append(spec)
    if has_phase:
        arr, spec = prep_cond(cond_phase)
        in_arrays.append(arr)
        in_specs.append(spec)

    kernel = _make_siren_kernel(float(w0), bool(is_last), has_freq, has_phase)

    out = pl.pallas_call(
        kernel,
        out_shape=jax.ShapeDtypeStruct((M_pad, out_f), jnp.float32),
        grid=grid,
        in_specs=in_specs,
        out_specs=pl.BlockSpec((TM, out_f), lambda i: (i, 0)),
        compiler_params=pltpu.CompilerParams(
            dimension_semantics=("parallel",)),
    )(*in_arrays)

    return out[:M] if M_pad != M else out


def init_siren_params(key, in_f, out_f, *, w0=30.0, is_first=False):
    """Deterministic init matching SirenLayer.init_weights."""
    kw, kb = jax.random.split(key)
    b_bound = (1.0 / in_f) if is_first else (jnp.sqrt(6.0 / in_f) / w0)
    weight = jax.random.uniform(kw, (out_f, in_f), jnp.float32,
                                minval=-b_bound, maxval=b_bound)
    bias = jax.random.uniform(kb, (out_f,), jnp.float32, minval=-3.0, maxval=3.0)
    return weight, bias


if __name__ == "__main__":
    key = jax.random.PRNGKey(0)
    k_x, k_p, k_f, k_ph = jax.random.split(key, 4)

    # Small but non-trivial shapes: ragged batch (exercises padding) and a
    # lane-dense out_f (full-width vst).  tile_m=64 forces a multi-tile grid.
    batch, in_f, out_f, w0 = 200, 32, 128, 30.0
    x = jax.random.normal(k_x, (batch, in_f), jnp.float32)
    weight, bias = init_siren_params(k_p, in_f, out_f, w0=w0, is_first=True)

    # --- hidden layer with per-row conditionals ---
    cond_freq = jax.random.normal(k_f, (batch, out_f), jnp.float32) * 0.1 + 1.0
    cond_phase = jax.random.normal(k_ph, (batch, out_f), jnp.float32) * 0.1
    out = siren_layer(x, weight, bias, w0=w0, is_last=False,
                      cond_freq=cond_freq, cond_phase=cond_phase, tile_m=64)
    jax.block_until_ready(out)
    ref = jnp.sin(w0 * (cond_freq * (x @ weight.T + bias) + cond_phase))
    assert jnp.allclose(out, ref, atol=1e-5, rtol=1e-5)

    # --- hidden layer, no conditionals (no ones/zeros streams) ---
    out_plain = siren_layer(x, weight, bias, w0=w0, is_last=False, tile_m=64)
    jax.block_until_ready(out_plain)
    ref_plain = jnp.sin(w0 * (x @ weight.T + bias))
    assert jnp.allclose(out_plain, ref_plain, atol=1e-5, rtol=1e-5)

    # --- last layer with a row-broadcast conditional freq ---
    freq_row = jax.random.normal(k_f, (out_f,), jnp.float32) * 0.1 + 1.0
    out_last = siren_layer(x, weight, bias, w0=w0, is_last=True,
                           cond_freq=freq_row, tile_m=64)
    jax.block_until_ready(out_last)
    ref_last = freq_row[None, :] * (x @ weight.T + bias)
    assert jnp.allclose(out_last, ref_last, atol=1e-5, rtol=1e-5)

    print("KERNEL_OK")
</pallas_src>

<mosaic_0001>
module attributes {stable_mosaic.version = 11 : i64} {
  func.func @kernel(%arg0: i32, %arg1: memref<64x32xf32, #tpu.memory_space<vmem>>, %arg2: memref<128x32xf32, #tpu.memory_space<vmem>>, %arg3: memref<1x128xf32, #tpu.memory_space<vmem>>, %arg4: memref<64x128xf32, #tpu.memory_space<vmem>>, %arg5: memref<64x128xf32, #tpu.memory_space<vmem>>, %arg6: memref<64x128xf32, #tpu.memory_space<vmem>>) attributes {dimension_semantics = [#tpu.dimension_semantics<parallel>], iteration_bounds = array<i64: 4>, scalar_prefetch = 0 : i64, scratch_operands = 0 : i64, tpu.core_type = #tpu.core_type<tc>, window_params = [{transform_indices = @transform_0, window_bounds = array<i64: 64, 32>}, {pipeline_mode = #tpu.pipeline_mode<synchronous>, transform_indices = @transform_1, window_bounds = array<i64: 128, 32>}, {pipeline_mode = #tpu.pipeline_mode<synchronous>, transform_indices = @transform_2, window_bounds = array<i64: 1, 128>}, {transform_indices = @transform_3, window_bounds = array<i64: 64, 128>}, {transform_indices = @transform_4, window_bounds = array<i64: 64, 128>}, {transform_indices = @transform_5, window_bounds = array<i64: 64, 128>}]} {
    %c0 = arith.constant 0 : index
    %c0_0 = arith.constant 0 : index
    %0 = vector.load %arg1[%c0, %c0_0] : memref<64x32xf32, #tpu.memory_space<vmem>>, vector<64x32xf32>
    %c0_1 = arith.constant 0 : index
    %c0_2 = arith.constant 0 : index
    %1 = vector.load %arg2[%c0_1, %c0_2] : memref<128x32xf32, #tpu.memory_space<vmem>>, vector<128x32xf32>
    %cst = arith.constant dense<0.000000e+00> : vector<64x128xf32>
    %2 = tpu.matmul %0, %1, %cst {dimension_numbers = #tpu.dot_dimension_numbers<[1], [1], [0], [0], [0, 0, 1, 0], [], []>} : vector<64x32xf32>, vector<128x32xf32>, vector<64x128xf32> -> vector<64x128xf32>
    %c0_3 = arith.constant 0 : index
    %c0_4 = arith.constant 0 : index
    %3 = vector.load %arg3[%c0_3, %c0_4] : memref<1x128xf32, #tpu.memory_space<vmem>>, vector<1x128xf32>
    %4 = vector.broadcast %3 : vector<1x128xf32> to vector<64x128xf32>
    %5 = arith.addf %2, %4 : vector<64x128xf32>
    %c0_5 = arith.constant 0 : index
    %c0_6 = arith.constant 0 : index
    %6 = vector.load %arg4[%c0_5, %c0_6] : memref<64x128xf32, #tpu.memory_space<vmem>>, vector<64x128xf32>
    %7 = arith.mulf %6, %5 : vector<64x128xf32>
    %c0_7 = arith.constant 0 : index
    %c0_8 = arith.constant 0 : index
    %8 = vector.load %arg5[%c0_7, %c0_8] : memref<64x128xf32, #tpu.memory_space<vmem>>, vector<64x128xf32>
    %9 = arith.addf %7, %8 : vector<64x128xf32>
    %cst_9 = arith.constant 3.000000e+01 : f32
    %10 = vector.broadcast %cst_9 : f32 to vector<64x128xf32>
    %11 = arith.mulf %10, %9 : vector<64x128xf32>
    %12 = math.sin %11 : vector<64x128xf32>
    %c0_10 = arith.constant 0 : index
    %c0_11 = arith.constant 0 : index
    %13 = vector.load %arg6[%c0_10, %c0_11] : memref<64x128xf32, #tpu.memory_space<vmem>>, vector<64x128xf32>
    tpu.vector_store %arg6[%c0_10, %c0_11], %12 {strides = array<i32>} : memref<64x128xf32, #tpu.memory_space<vmem>>, vector<64x128xf32>,
    return
  }
  func.func @transform_0(%arg0: i32) -> (i32, i32) {
    %c0_i32 = arith.constant 0 : i32
    %c0_i32_0 = arith.constant 0 : i32
    return %arg0, %c0_i32 : i32, i32
  }
  func.func @transform_1(%arg0: i32) -> (i32, i32) {
    %c0_i32 = arith.constant 0 : i32
    %c0_i32_0 = arith.constant 0 : i32
    %c0_i32_1 = arith.constant 0 : i32
    return %c0_i32, %c0_i32_0 : i32, i32
  }
  func.func @transform_2(%arg0: i32) -> (i32, i32) {
    %c0_i32 = arith.constant 0 : i32
    %c0_i32_0 = arith.constant 0 : i32
    %c0_i32_1 = arith.constant 0 : i32
    return %c0_i32, %c0_i32_0 : i32, i32
  }
  func.func @transform_3(%arg0: i32) -> (i32, i32) {
    %c0_i32 = arith.constant 0 : i32
    %c0_i32_0 = arith.constant 0 : i32
    return %arg0, %c0_i32 : i32, i32
  }
  func.func @transform_4(%arg0: i32) -> (i32, i32) {
    %c0_i32 = arith.constant 0 : i32
    %c0_i32_0 = arith.constant 0 : i32
    return %arg0, %c0_i32 : i32, i32
  }
  func.func @transform_5(%arg0: i32) -> (i32, i32) {
    %c0_i32 = arith.constant 0 : i32
    %c0_i32_0 = arith.constant 0 : i32
    return %arg0, %c0_i32 : i32, i32
  }
}

</mosaic_0001>

<llo_original>
// kernel: tpu_custom_call.1
$region0: #{tpu_custom_call.1}
  #allocation0 [shape = 'u32[]', space=smem, size = 0x4, offset = 0x4, fixed_abs, tag = 'smem constant byte address 0x4 - core index']
  #allocation1 [shape = 'u32[144,128]{1,0:T(1,128)}', space=vmem, size = 0x12000, scoped, tag = 'internal scratch']
  %s0 = inlined_call_operand.vmem [shape: f32[256,32], index: 0, kind: input, shape index: {}]
  %s1 = inlined_call_operand.vmem [shape: f32[128,32], index: 1, kind: input, shape index: {}]
  %s2 = inlined_call_operand.vmem [shape: f32[1,128], index: 2, kind: input, shape index: {}]
  %s3 = inlined_call_operand.vmem [shape: f32[256,128], index: 3, kind: input, shape index: {}]
  %s4 = inlined_call_operand.hbm [shape: f32[256,128], index: 4, kind: input, shape index: {}]
  %s5 = inlined_call_operand.hbm [shape: f32[256,128], index: 5, kind: output, shape index: {}]
  %s6 = sld [smem:[#allocation0]]
  $region57: #{tpu_custom_call.1} parent=0
    _
  %s8 = ssub.s32 1, %s6
  %s9 = scalar_select 0, %s8, %s6
  $region1: #{tpu_custom_call.1} parent=0
    #allocation2 [shape = 'u8[65536]{0}', space=vmem, size = 0x10000, scoped, tag = 'input window, operand 4']
    #allocation3 [shape = 's32[2]{0}', space=sflag, size = 0x8, scoped, tag = 'scoped memory for tpu_custom_call.1']
    #allocation4 [shape = 's32[2]{0}', space=sflag, size = 0x8, scoped, tag = 'scoped memory for tpu_custom_call.1']
    #allocation5 [shape = 'u8[65536]{0}', space=vmem, size = 0x10000, scoped, tag = 'output window, operand 0']
    %10 = vsyncpa [#allocation3], 0
    %s11 = scalar_lea.sflag [#allocation3], 1
    %12 = vsyncpa %s11, 0
    %13 = vsyncpa [#allocation4], 0
    %s14 = scalar_lea.sflag [#allocation4], 1
    %15 = vsyncpa %s14, 0
    loop: start=0, step=1, limit=6
    $region2: #{tpu_custom_call.1} parent=1 // loop_pre_header
      _
    $region3: #{tpu_custom_call.1} parent=1 // loop_header
      %s17 = sphi 0, %s21
      %p18 = scmp.ge.s32.totalorder %s17, 6
      %s27 = sphi 0, %s29
      %s30 = sphi 0, %s27
      %s31 = sphi 0, %s30
      %s47 = sphi 0, %s31
      %s51 = sphi 0, %s51
      %s53 = sphi 0, %s51
      %s54 = sphi 0, %s53
      %s68 = sphi 0, %s54
      %s72 = sphi 0, %s72
      %s74 = sphi 0, %s72
      %s75 = sphi 0, %s74
      %s89 = sphi 0, %s75
      %s95 = sphi 0, %s97
      %s98 = sphi 0, %s95
      %s99 = sphi 0, %s98
      %s115 = sphi 0, %s99
      %s121 = sphi 0, %s123
      %s124 = sphi 0, %s121
      %s125 = sphi 0, %s124
      %s141 = sphi 0, %s125
      %s147 = sphi 0, %s149
      %s150 = sphi 0, %s147
      %s151 = sphi 0, %s150
      %s167 = sphi 0, %s151
    $region4: #{tpu_custom_call.1} parent=1 // loop_header_branch
      %20 = sbr.rel (%p18) target = $region8
    $region5: #{tpu_custom_call.1} parent=1 // loop_body
      %s22 = ssub.s32 %s17, 1
      %s23 = ssub.s32 %s17, 2
      %s24 = sadd.s32 %s17, 1
      %s25 = ssub.s32 %s17, %s24
      %p26 = scmp.eq.s32.totalorder %s25, 0
      %s28 = sadd.s32 %s27, 1
      %s29 = scalar_select %p26, %s27, %s28
      %p32 = pneg %p26
      %p33 = scmp.eq.s32.totalorder %s17, 3
      %p34 = por %p32, %p33
      %p35 = scmp.ne.s32.totalorder %s27, %s30
      %p36 = scmp.eq.s32.totalorder %s17, 0
      %p37 = por %p35, %p36
      %p38 = scmp.ne.s32.totalorder %s27, %s30
      %p39 = scmp.eq.s32.totalorder %s22, 3
      %p40 = por %p38, %p39
      %p41 = scmp.ne.s32.totalorder %s30, %s31
      %p42 = scmp.eq.s32.totalorder %s22, 0
      %p43 = por %p41, %p42
      %p44 = scmp.ne.s32.totalorder %s30, %s31
      %p45 = scmp.eq.s32.totalorder %s23, 3
      %p46 = por %p44, %p45
      %p48 = scmp.ne.s32.totalorder %s31, %s47
      %p49 = scmp.eq.s32.totalorder %s23, 0
      %p50 = por %p48, %p49
      %s52 = sadd.s32 %s51, 1
      %p55 = scmp.eq.s32.totalorder %s17, 3
      %p56 = scmp.ne.s32.totalorder %s51, %s53
      %p57 = scmp.eq.s32.totalorder %s17, 0
      %p58 = por %p56, %p57
      %p59 = scmp.ne.s32.totalorder %s51, %s53
      %p60 = scmp.eq.s32.totalorder %s22, 3
      %p61 = por %p59, %p60
      %p62 = scmp.ne.s32.totalorder %s53, %s54
      %p63 = scmp.eq.s32.totalorder %s22, 0
      %p64 = por %p62, %p63
      %p65 = scmp.ne.s32.totalorder %s53, %s54
      %p66 = scmp.eq.s32.totalorder %s23, 3
      %p67 = por %p65, %p66
      %p69 = scmp.ne.s32.totalorder %s54, %s68
      %p70 = scmp.eq.s32.totalorder %s23, 0
      %p71 = por %p69, %p70
      %s73 = sadd.s32 %s72, 1
      %p76 = scmp.eq.s32.totalorder %s17, 3
      %p77 = scmp.ne.s32.totalorder %s72, %s74
      %p78 = scmp.eq.s32.totalorder %s17, 0
      %p79 = por %p77, %p78
      %p80 = scmp.ne.s32.totalorder %s72, %s74
      %p81 = scmp.eq.s32.totalorder %s22, 3
      %p82 = por %p80, %p81
      %p83 = scmp.ne.s32.totalorder %s74, %s75
      %p84 = scmp.eq.s32.totalorder %s22, 0
      %p85 = por %p83, %p84
      %p86 = scmp.ne.s32.totalorder %s74, %s75
      %p87 = scmp.eq.s32.totalorder %s23, 3
      %p88 = por %p86, %p87
      %p90 = scmp.ne.s32.totalorder %s75, %s89
      %p91 = scmp.eq.s32.totalorder %s23, 0
      %p92 = por %p90, %p91
      %s93 = ssub.s32 %s17, %s24
      %p94 = scmp.eq.s32.totalorder %s93, 0
      %s96 = sadd.s32 %s95, 1
      %s97 = scalar_select %p94, %s95, %s96
      %p100 = pneg %p94
      %p101 = scmp.eq.s32.totalorder %s17, 3
      %p102 = por %p100, %p101
      %p103 = scmp.ne.s32.totalorder %s95, %s98
      %p104 = scmp.eq.s32.totalorder %s17, 0
      %p105 = por %p103, %p104
      %p106 = scmp.ne.s32.totalorder %s95, %s98
      %p107 = scmp.eq.s32.totalorder %s22, 3
      %p108 = por %p106, %p107
      %p109 = scmp.ne.s32.totalorder %s98, %s99
      %p110 = scmp.eq.s32.totalorder %s22, 0
      %p111 = por %p109, %p110
      %p112 = scmp.ne.s32.totalorder %s98, %s99
      %p113 = scmp.eq.s32.totalorder %s23, 3
      %p114 = por %p112, %p113
      %p116 = scmp.ne.s32.totalorder %s99, %s115
      %p117 = scmp.eq.s32.totalorder %s23, 0
      %p118 = por %p116, %p117
      %s119 = ssub.s32 %s17, %s24
      %p120 = scmp.eq.s32.totalorder %s119, 0
      %s122 = sadd.s32 %s121, 1
      %s123 = scalar_select %p120, %s121, %s122
      %p126 = pneg %p120
      %p127 = scmp.eq.s32.totalorder %s17, 3
      %p128 = por %p126, %p127
      %p129 = scmp.ne.s32.totalorder %s121, %s124
      %p130 = scmp.eq.s32.totalorder %s17, 0
      %p131 = por %p129, %p130
      %p132 = scmp.ne.s32.totalorder %s121, %s124
      %p133 = scmp.eq.s32.totalorder %s22, 3
      %p134 = por %p132, %p133
      %p135 = scmp.ne.s32.totalorder %s124, %s125
      %p136 = scmp.eq.s32.totalorder %s22, 0
      %p137 = por %p135, %p136
      %p138 = scmp.ne.s32.totalorder %s124, %s125
      %p139 = scmp.eq.s32.totalorder %s23, 3
      %p140 = por %p138, %p139
      %p142 = scmp.ne.s32.totalorder %s125, %s141
      %p143 = scmp.eq.s32.totalorder %s23, 0
      %p144 = por %p142, %p143
      %s145 = ssub.s32 %s17, %s24
      %p146 = scmp.eq.s32.totalorder %s145, 0
      %s148 = sadd.s32 %s147, 1
      %s149 = scalar_select %p146, %s147, %s148
      %p152 = pneg %p146
      %p153 = scmp.eq.s32.totalorder %s17, 3
      %p154 = por %p152, %p153
      %p155 = scmp.ne.s32.totalorder %s147, %s150
      %p156 = scmp.eq.s32.totalorder %s17, 0
      %p157 = por %p155, %p156
      %p158 = scmp.ne.s32.totalorder %s147, %s150
      %p159 = scmp.eq.s32.totalorder %s22, 3
      %p160 = por %p158, %p159
      %p161 = scmp.ne.s32.totalorder %s150, %s151
      %p162 = scmp.eq.s32.totalorder %s22, 0
      %p163 = por %p161, %p162
      %p164 = scmp.ne.s32.totalorder %s150, %s151
      %p165 = scmp.eq.s32.totalorder %s23, 3
      %p166 = por %p164, %p165
      %p168 = scmp.ne.s32.totalorder %s151, %s167
      %p169 = scmp.eq.s32.totalorder %s23, 0
      %p170 = por %p168, %p169
      %p171 = scmp.le.s32.totalorder 1, %s17
      %p172 = scmp.lt.s32.totalorder %s17, 5
      %p173 = pnand %p171, %p172
      %p174 = pneg %p173
      // Predicated region
      $region9: #{tpu_custom_call.1} parent=5 // pred_check
        _
      $region10: #{tpu_custom_call.1} parent=5 // pred_check_branch
        %176 = sbr.rel (%p173) target = $region12
      $region11: #{tpu_custom_call.1} parent=5 // pred_region
        %s177 = ssub.s32 %s17, 1
        // Predicated region
        $region13: #{tpu_custom_call.1} parent=11 // pred_check
          %p178 = pneg %p64
        $region14: #{tpu_custom_call.1} parent=11 // pred_check_branch
          %180 = sbr.rel (%p178) target = $region16
        $region15: #{tpu_custom_call.1} parent=11 // pred_region
          _
        $region16: #{tpu_custom_call.1} parent=11 // pred_fallthru
          _
        // Predicated region
        $region17: #{tpu_custom_call.1} parent=11 // pred_check
          %p181 = pneg %p85
        $region18: #{tpu_custom_call.1} parent=11 // pred_check_branch
          %183 = sbr.rel (%p181) target = $region20
        $region19: #{tpu_custom_call.1} parent=11 // pred_region
          _
        $region20: #{tpu_custom_call.1} parent=11 // pred_fallthru
          _
      $region12: #{tpu_custom_call.1} parent=5 // pred_fallthru
        _
      %p184 = scmp.lt.s32.totalorder %s17, 4
      // Predicated region
      $region21: #{tpu_custom_call.1} parent=5 // pred_check
        %p185 = pneg %p184
      $region22: #{tpu_custom_call.1} parent=5 // pred_check_branch
        %187 = sbr.rel (%p185) target = $region24
      $region23: #{tpu_custom_call.1} parent=5 // pred_region
        // Predicated region
        $region25: #{tpu_custom_call.1} parent=23 // pred_check
          %p188 = pneg %p37
        $region26: #{tpu_custom_call.1} parent=23 // pred_check_branch
          %190 = sbr.rel (%p188) target = $region28
        $region27: #{tpu_custom_call.1} parent=23 // pred_region
          %s191 = smul.u32 8, %s17
          %p192 = scmp.lt.s32.totalorder %s191, 31
          %s193 = scalar_select %p192, %s191, 31
          %s194 = smul.addr %s193, 8
          %s195 = scalar_lea.vmem %s0, %s194
          %s196 = smul.u32 8, %s17
        $region28: #{tpu_custom_call.1} parent=23 // pred_fallthru
          _
        // Predicated region
        $region29: #{tpu_custom_call.1} parent=23 // pred_check
          %p197 = pneg %p105
        $region30: #{tpu_custom_call.1} parent=23 // pred_check_branch
          %199 = sbr.rel (%p197) target = $region32
        $region31: #{tpu_custom_call.1} parent=23 // pred_region
          %s200 = smul.u32 8, %s17
          %p201 = scmp.lt.s32.totalorder %s200, 31
          %s202 = scalar_select %p201, %s200, 31
          %s203 = smul.addr %s202, 8
          %s204 = scalar_lea.vmem %s3, %s203
          %s205 = smul.u32 8, %s17
        $region32: #{tpu_custom_call.1} parent=23 // pred_fallthru
          _
        // Predicated region
        $region33: #{tpu_custom_call.1} parent=23 // pred_check
          %p206 = pneg %p131
        $region34: #{tpu_custom_call.1} parent=23 // pred_check_branch
          %208 = sbr.rel (%p206) target = $region36
        $region35: #{tpu_custom_call.1} parent=23 // pred_region
          %s209 = sand.u32 %s121, 1
          %s210 = scalar_lea.sflag [#allocation3], %s209
          %s211 = sand.u32 %s121, 1
          %s212 = smul.addr %s211, 64
          %s213 = scalar_lea.vmem [#allocation2], %s212
          %s214 = smul.u32 8, %s17
          %s216 = ssub.s32 1024, 1024
          %217 = vsyncadd %s210, %s216
          %s218 = smul.addr %s214, 128
          %s219 = scalar_lea.hbm %s4, %s218
          %s220 = sshll.u32 %s213, 4
          %s221 = int_to_ptr.vmem [resolvable:$true] %s220
          %226 = dma.hbm_to_vmem [thread:$0]  %s219, 1024, %s221, %s210, 128, 128, 8
        $region36: #{tpu_custom_call.1} parent=23 // pred_fallthru
          _
      $region24: #{tpu_custom_call.1} parent=5 // pred_fallthru
        _
      %p227 = scmp.le.s32.totalorder 1, %s17
      %p228 = scmp.lt.s32.totalorder %s17, 5
      %p229 = pnand %p227, %p228
      %p230 = pneg %p229
      // Predicated region
      $region37: #{tpu_custom_call.1} parent=5 // pred_check
        _
      $region38: #{tpu_custom_call.1} parent=5 // pred_check_branch
        %232 = sbr.rel (%p229) target = $region40
      $region39: #{tpu_custom_call.1} parent=5 // pred_region
        %s233 = ssub.s32 %s17, 1
        %s234 = sand.u32 %s124, 1
        %s235 = scalar_lea.sflag [#allocation3], %s234
        %s236 = sand.u32 %s124, 1
        %s237 = smul.addr %s236, 64
        %s238 = scalar_lea.vmem [#allocation2], %s237
        // Predicated region
        $region41: #{tpu_custom_call.1} parent=39 // pred_check
          %p239 = pneg %p137
        $region42: #{tpu_custom_call.1} parent=39 // pred_check_branch
          %241 = sbr.rel (%p239) target = $region44
        $region43: #{tpu_custom_call.1} parent=39 // pred_region
          %242 = dma.done %s235, 1024
        $region44: #{tpu_custom_call.1} parent=39 // pred_fallthru
          _
        %s243 = smul.u32 8, %s22
        %p244 = scmp.lt.s32.totalorder %s243, 31
        %s245 = scalar_select %p244, %s243, 31
        %s246 = smul.addr %s245, 8
        %s247 = scalar_lea.vmem %s0, %s246
        %p248 = pneg %p43
        %p249 = pneg %p40
        %p250 = pneg %p64
        %p251 = pneg %p61
        %p252 = pneg %p85
        %p253 = pneg %p82
        %s254 = smul.u32 8, %s22
        %p255 = scmp.lt.s32.totalorder %s254, 31
        %s256 = scalar_select %p255, %s254, 31
        %s257 = smul.addr %s256, 8
        %s258 = scalar_lea.vmem %s3, %s257
        %p259 = pneg %p111
        %p260 = pneg %p108
        %s261 = sand.u32 %s124, 1
        %s262 = scalar_lea.sflag [#allocation3], %s261
        %s263 = sand.u32 %s124, 1
        %s264 = smul.addr %s263, 64
        %s265 = scalar_lea.vmem [#allocation2], %s264
        %p266 = pneg %p137
        %p267 = pneg %p134
        %p268 = pneg %p163
        %p269 = pneg %p160
        %s270 = sand.u32 %s150, 1
        %s271 = scalar_lea.sflag [#allocation4], %s270
        %s272 = sand.u32 %s150, 1
        %s273 = smul.addr %s272, 64
        %s274 = scalar_lea.vmem [#allocation5], %s273
        %s275 = smul.u32 8, %s22
        %p276 = scmp.lt.s32.totalorder %s275, 31
        %s277 = scalar_select %p276, %s275, 31
        %s278 = smul.addr %s277, 8
        %s279 = scalar_lea.vmem %s0, %s278
        %s280 = smul.u32 8, %s22
        %s281 = smul.u32 8, %s22
        %p282 = scmp.lt.s32.totalorder %s281, 31
        %s283 = scalar_select %p282, %s281, 31
        %s284 = smul.addr %s283, 8
        %s285 = scalar_lea.vmem %s3, %s284
        %s286 = smul.u32 8, %s22
        %s287 = smul.u32 8, %s22
        %s288 = smul.u32 8, %s22
        %v289 = vld [vmem:[%s279] sm:$0xff]
        %v290 = vld [vmem:[%s279 + $0x8] sm:$0xff]
        %v291 = vld [vmem:[%s279 + $0x10] sm:$0xff]
        %v292 = vld [vmem:[%s279 + $0x18] sm:$0xff]
        %v293 = vld [vmem:[%s279 + $0x20] sm:$0xff]
        %v294 = vld [vmem:[%s279 + $0x28] sm:$0xff]
        %v295 = vld [vmem:[%s279 + $0x30] sm:$0xff]
        %v296 = vld [vmem:[%s279 + $0x38] sm:$0xff]
        %v297 = vld [vmem:[%s1] sm:$0xff]
        %v298 = vld [vmem:[%s1 + $0x8] sm:$0xff]
        %v299 = vld [vmem:[%s1 + $0x10] sm:$0xff]
        %v300 = vld [vmem:[%s1 + $0x18] sm:$0xff]
        %v301 = vld [vmem:[%s1 + $0x20] sm:$0xff]
        %v302 = vld [vmem:[%s1 + $0x28] sm:$0xff]
        %v303 = vld [vmem:[%s1 + $0x30] sm:$0xff]
        %v304 = vld [vmem:[%s1 + $0x38] sm:$0xff]
        %v305 = vld [vmem:[%s1 + $0x40] sm:$0xff]
        %v306 = vld [vmem:[%s1 + $0x48] sm:$0xff]
        %v307 = vld [vmem:[%s1 + $0x50] sm:$0xff]
        %v308 = vld [vmem:[%s1 + $0x58] sm:$0xff]
        %v309 = vld [vmem:[%s1 + $0x60] sm:$0xff]
        %v310 = vld [vmem:[%s1 + $0x68] sm:$0xff]
        %v311 = vld [vmem:[%s1 + $0x70] sm:$0xff]
        %v312 = vld [vmem:[%s1 + $0x78] sm:$0xff]
        %v313 = vld [vmem:[%s2] sm:$0x1]
        %v315 = vlaneseq
        %v316 = vshrl.u32 %v315, 7
        %v317 = vsub.s32 0, %v316
        %v318 = vrot.slane %v313, %v317
        %vm320 = vcmask 261120
        %v322 = vsel %vm320, %v289, 0
        %v325 = vsel %vm320, %v290, 0
        %v328 = vsel %vm320, %v291, 0
        %v331 = vsel %vm320, %v292, 0
        %v334 = vsel %vm320, %v293, 0
        %v337 = vsel %vm320, %v294, 0
        %v340 = vsel %vm320, %v295, 0
        %v343 = vsel %vm320, %v296, 0
        %v346 = vsel %vm320, %v297, 0
        %v349 = vsel %vm320, %v298, 0
        %v352 = vsel %vm320, %v299, 0
        %v355 = vsel %vm320, %v300, 0
        %v358 = vsel %vm320, %v301, 0
        %v361 = vsel %vm320, %v302, 0
        %v364 = vsel %vm320, %v303, 0
        %v367 = vsel %vm320, %v304, 0
        %v370 = vsel %vm320, %v305, 0
        %v373 = vsel %vm320, %v306, 0
        %v376 = vsel %vm320, %v307, 0
        %v379 = vsel %vm320, %v308, 0
        %v382 = vsel %vm320, %v309, 0
        %v385 = vsel %vm320, %v310, 0
        %v388 = vsel %vm320, %v311, 0
        %v391 = vsel %vm320, %v312, 0
        %393 = vmatprep.subr.mxu0 0.0
        %394 = vmatpush1.xpose.msra.mxu0 %v391
        %395 = vmatprep.subr.mxu0 0.0
        %396 = vmatpush1.xpose.msra.mxu0 %v388
        %397 = vmatprep.subr.mxu0 0.0
        %398 = vmatpush1.xpose.msra.mxu0 %v385
        %399 = vmatprep.subr.mxu0 0.0
        %400 = vmatpush1.xpose.msra.mxu0 %v382
        %401 = vmatprep.subr.mxu0 0.0
        %402 = vmatpush1.xpose.msra.mxu0 %v379
        %403 = vmatprep.subr.mxu0 0.0
        %404 = vmatpush1.xpose.msra.mxu0 %v376
        %405 = vmatprep.subr.mxu0 0.0
        %406 = vmatpush1.xpose.msra.mxu0 %v373
        %407 = vmatprep.subr.mxu0 0.0
        %408 = vmatpush1.xpose.msra.mxu0 %v370
        %409 = vmatprep.subr.mxu0 0.0
        %410 = vmatpush1.xpose.msra.mxu0 %v367
        %411 = vmatprep.subr.mxu0 0.0
        %412 = vmatpush1.xpose.msra.mxu0 %v364
        %413 = vmatprep.subr.mxu0 0.0
        %414 = vmatpush1.xpose.msra.mxu0 %v361
        %415 = vmatprep.subr.mxu0 0.0
        %416 = vmatpush1.xpose.msra.mxu0 %v358
        %417 = vmatprep.subr.mxu0 0.0
        %418 = vmatpush1.xpose.msra.mxu0 %v355
        %419 = vmatprep.subr.mxu0 0.0
        %420 = vmatpush1.xpose.msra.mxu0 %v352
        %421 = vmatprep.subr.mxu0 0.0
        %422 = vmatpush1.xpose.msra.mxu0 %v349
        %423 = vmatprep.subr.mxu0 0.0
        %424 = vmatpush1.xpose.msra.mxu0 %v346
        %425 = vmatprep.subr.mxu0 0.0
        %426 = vmatpush2.xpose.msra.mxu0 0.0
        %427 = vmatprep.subr.mxu0 0.0
        %428 = vmatpush2.xpose.msra.mxu0 0.0
        %429 = vmatprep.subr.mxu0 0.0
        %430 = vmatpush2.xpose.msra.mxu0 0.0
        %431 = vmatprep.subr.mxu0 0.0
        %432 = vmatpush2.xpose.msra.mxu0 0.0
        %433 = vmatprep.subr.mxu0 0.0
        %434 = vmatpush2.xpose.msra.mxu0 0.0
        %435 = vmatprep.subr.mxu0 0.0
        %436 = vmatpush2.xpose.msra.mxu0 0.0
        %437 = vmatprep.subr.mxu0 0.0
        %438 = vmatpush2.xpose.msra.mxu0 0.0
        %439 = vmatprep.subr.mxu0 0.0
        %440 = vmatpush2.xpose.msra.mxu0 0.0
        %441 = vmatprep.subr.mxu0 0.0
        %442 = vmatpush2.xpose.msra.mxu0 0.0
        %443 = vmatprep.subr.mxu0 0.0
        %444 = vmatpush2.xpose.msra.mxu0 0.0
        %445 = vmatprep.subr.mxu0 0.0
        %446 = vmatpush2.xpose.msra.mxu0 0.0
        %447 = vmatprep.subr.mxu0 0.0
        %448 = vmatpush2.xpose.msra.mxu0 0.0
        %449 = vmatprep.subr.mxu0 0.0
        %450 = vmatpush2.xpose.msra.mxu0 0.0
        %451 = vmatprep.subr.mxu0 0.0
        %452 = vmatpush2.xpose.msra.mxu0 0.0
        %453 = vmatprep.subr.mxu0 0.0
        %454 = vmatpush2.xpose.msra.mxu0 0.0
        %455 = vmatprep.subr.mxu0 0.0
        %456 = vmatpush2.xpose.msra.mxu0 0.0
        %457 = vmatprep.mubr.f32.mxu0 0.0
        %458 = vmatmul.mubr.f32.gmra.mxu0 %v322
        %v459 = vpop.f32.mrf.mxu0
        %v460 = vadd.f32 %v318, %v459
        %v461 = vpop.f32.mrf.mxu0
        %462 = vmatprep.mubr.f32.mxu0 0.0
        %463 = vmatmul.mubr.f32.gmra.mxu0 %v325
        %v464 = vpop.f32.mrf.mxu0
        %v465 = vadd.f32 %v318, %v464
        %v466 = vpop.f32.mrf.mxu0
        %467 = vmatprep.mubr.f32.mxu0 0.0
        %468 = vmatmul.mubr.f32.gmra.mxu0 %v328
        %v469 = vpop.f32.mrf.mxu0
        %v470 = vadd.f32 %v318, %v469
        %v471 = vpop.f32.mrf.mxu0
        %472 = vmatprep.mubr.f32.mxu0 0.0
        %473 = vmatmul.mubr.f32.gmra.mxu0 %v331
        %v474 = vpop.f32.mrf.mxu0
        %v475 = vadd.f32 %v318, %v474
        %v476 = vpop.f32.mrf.mxu0
        %477 = vmatprep.mubr.f32.mxu0 0.0
        %478 = vmatmul.mubr.f32.gmra.mxu0 %v334
        %v479 = vpop.f32.mrf.mxu0
        %v480 = vadd.f32 %v318, %v479
        %v481 = vpop.f32.mrf.mxu0
        %482 = vmatprep.mubr.f32.mxu0 0.0
        %483 = vmatmul.mubr.f32.gmra.mxu0 %v337
        %v484 = vpop.f32.mrf.mxu0
        %v485 = vadd.f32 %v318, %v484
        %v486 = vpop.f32.mrf.mxu0
        %487 = vmatprep.mubr.f32.mxu0 0.0
        %488 = vmatmul.mubr.f32.gmra.mxu0 %v340
        %v489 = vpop.f32.mrf.mxu0
        %v490 = vadd.f32 %v318, %v489
        %v491 = vpop.f32.mrf.mxu0
        %492 = vmatprep.mubr.f32.mxu0 0.0
        %493 = vmatmul.mubr.f32.gmra.mxu0 %v343
        %v494 = vpop.f32.mrf.mxu0
        %v495 = vadd.f32 %v318, %v494
        %v496 = vpop.f32.mrf.mxu0
        %497 = vdwg.mxu0
        %v498 = vld [vmem:[%s285] sm:$0xff]
        %v499 = vld [vmem:[%s285 + $0x8] sm:$0xff]
        %v500 = vld [vmem:[%s285 + $0x10] sm:$0xff]
        %v501 = vld [vmem:[%s285 + $0x18] sm:$0xff]
        %v502 = vld [vmem:[%s285 + $0x20] sm:$0xff]
        %v503 = vld [vmem:[%s285 + $0x28] sm:$0xff]
        %v504 = vld [vmem:[%s285 + $0x30] sm:$0xff]
        %v505 = vld [vmem:[%s285 + $0x38] sm:$0xff]
        %v506 = vmul.f32 %v498, %v460
        %v507 = vmul.f32 %v499, %v465
        %v508 = vmul.f32 %v500, %v470
        %v509 = vmul.f32 %v501, %v475
        %v510 = vmul.f32 %v502, %v480
        %v511 = vmul.f32 %v503, %v485
        %v512 = vmul.f32 %v504, %v490
        %v513 = vmul.f32 %v505, %v495
        %v514 = vld [vmem:[%s238] sm:$0xff]
        %v515 = vld [vmem:[%s238 + $0x8] sm:$0xff]
        %v516 = vld [vmem:[%s238 + $0x10] sm:$0xff]
        %v517 = vld [vmem:[%s238 + $0x18] sm:$0xff]
        %v518 = vld [vmem:[%s238 + $0x20] sm:$0xff]
        %v519 = vld [vmem:[%s238 + $0x28] sm:$0xff]
        %v520 = vld [vmem:[%s238 + $0x30] sm:$0xff]
        %v521 = vld [vmem:[%s238 + $0x38] sm:$0xff]
        %v522 = vadd.f32 %v506, %v514
        %v523 = vadd.f32 %v507, %v515
        %v524 = vadd.f32 %v508, %v516
        %v525 = vadd.f32 %v509, %v517
        %v526 = vadd.f32 %v510, %v518
        %v527 = vadd.f32 %v511, %v519
        %v528 = vadd.f32 %v512, %v520
        %v529 = vadd.f32 %v513, %v521
        %v530 = vmul.f32 %v522, 30.0
        %v531 = vmul.f32 %v523, 30.0
        %v532 = vmul.f32 %v524, 30.0
        %v533 = vmul.f32 %v525, 30.0
        %v534 = vmul.f32 %v526, 30.0
        %v535 = vmul.f32 %v527, 30.0
        %v536 = vmul.f32 %v528, 30.0
        %v537 = vmul.f32 %v529, 30.0
        %v538 = vand.u32 2147483647, %v530
        %vm539 = vcmp.le.f32.partialorder %v538, 0.7853982
        %vm540 = vcmp.lt.s32.totalorder %v530, 0
        %v541 = vand.u32 %v530, 2139095040
        %v542 = vshrl.u32 %v541, 23
        %v543 = vsub.s32 %v542, 127
        %v544 = vand.u32 2147483647, %v530
        %v545 = vand.u32 %v544, 8388607
        %v546 = vor.u32 %v545, 8388608
        %v547 = vsub.s32 0, %v546
        %v548 = vadd.s32 %v543, 1
        %vm549 = vcmp.gt.s32.totalorder %v548, 0
        %v550 = vsel %vm549, %v548, 0
        %v551 = vshrl.u32 %v550, 5
        %v552 = vand.u32 %v550, 31
        %v553 = vsub.s32 32, %v552
        %v554 = vshrl.u32 683565275, %v553
        %v555 = vshll.u32 683565275, %v552
        %v556 = vshrl.u32 2475754826, %v553
        %v557 = vor.u32 %v555, %v556
        %v558 = vshll.u32 2475754826, %v552
        %v559 = vshrl.u32 2131351028, %v553
        %v560 = vor.u32 %v558, %v559
        %v561 = vshll.u32 2131351028, %v552
        %v562 = vshrl.u32 2102212464, %v553
        %v563 = vor.u32 %v561, %v562
        %v564 = vshll.u32 2102212464, %v552
        %v565 = vshrl.u32 920167782, %v553
        %v566 = vor.u32 %v564, %v565
        %v567 = vshll.u32 920167782, %v552
        %v568 = vshrl.u32 1326507024, %v553
        %v569 = vor.u32 %v567, %v568
        %vm570 = vcmp.lt.s32.totalorder %v551, 1
        %vm571 = vcmp.lt.s32.totalorder %v551, 2
        %vm572 = vcmp.lt.s32.totalorder %v551, 3
        %vm573 = vcmp.lt.s32.totalorder %v551, 4
        %v574 = vsel %vm570, %v554, %v557
        %v575 = vsel %vm573, %v563, 2102212464
        %v576 = vsel %vm572, %v560, %v575
        %v577 = vsel %vm571, %v574, %v576
        %v578 = vsel %vm570, %v557, %v560
        %v579 = vsel %vm573, %v566, 920167782
        %v580 = vsel %vm572, %v563, %v579
        %v581 = vsel %vm571, %v578, %v580
        %v582 = vsel %vm570, %v560, %v563
        %v583 = vsel %vm573, %v569, 1326507024
        %v584 = vsel %vm572, %v566, %v583
        %v585 = vsel %vm571, %v582, %v584
        %v586 = vshll.u32 %v546, 8
        %v587 = vmul.u32.u64.compose %v586, %v585
        %v588 = vextract.low.u32 %v587
        %v589 = vextract.high.u32 %v587
        %v590 = vmul.u32.u64.compose %v586, %v581
        %v591 = vextract.low.u32 %v590
        %v592 = vextract.high.u32 %v590
        %v593 = vmul.u32 %v586, %v577
        %v594 = vadd.s32 %v589, %v591
        %vm595 = vc.u32 %v589, %v591
        %v596 = vadd.s32 %v592, 1
        %v597 = vsel %vm595, %v596, %v592
        %v598 = vadd.s32 %v593, %v597
        %v599 = vadd.s32 %v598, 536870912
        %v600 = vshrl.u32 %v599, 30
        %v601 = vshll.u32 %v600, 30
        %v602 = vsub.s32 %v598, %v601
        %vm603 = vcmp.lt.s32.totalorder %v602, 0
        %v604 = vsub.s32 0, %v602
        %v605 = vsel %vm603, %v604, %v602
        %v606 = vclz %v605
        %v607 = vsub.s32 %v606, 2
        %vm608 = vcmp.gt.s32.totalorder 0, %v607
        %v609 = vsel %vm608, 0, %v607
        %v610 = vsub.s32 32, %v609
        %v611 = vshll.u32 %v602, %v609
        %v612 = vshrl.u32 %v594, %v610
        %v613 = vor.u32 %v611, %v612
        %v614 = vsub.s32 4294967266, %v609
        %v615 = vadd.s32 %v614, 127
        %v616 = vshll.u32 %v615, 23
        %v617 = vor.u32 4788187, %v616
        %v618 = vand.u32 2147483647, %v617
        %v620 = vcvt.s32.f32 %v613
        %v621 = vmul.f32 %v620, %v618
        %v622 = vxor.u32 %v621, 2147483648
        %v623 = vsel %vm540, %v622, %v621
        %v624 = vsub.s32 4, %v600
        %v625 = vsel %vm540, %v624, %v600
        %v626 = vsel %vm539, %v530, %v623
        %v627 = vsel %vm539, 0, %v625
        %v628 = vcosq.f32.pop %v626
        %v629 = vsinq.f32.pop %v626
        %vm630 = vweird.f32 %v530
        %v631 = vadd.s32 %v627, 3
        %v632 = vand.u32 %v631, 3
        %vm633 = vcmp.lt.s32.totalorder %v632, 2
        %vm634 = vcmp.eq.s32.totalorder %v632, 0
        %v635 = vxor.u32 %v629, 2147483648
        %v636 = vsel %vm634, %v628, %v635
        %vm637 = vcmp.eq.s32.totalorder %v632, 2
        %v638 = vxor.u32 %v628, 2147483648
        %v639 = vsel %vm637, %v638, %v629
        %v640 = vsel %vm633, %v636, %v639
        %v641 = vsel %vm630, nan, %v640
        %v642 = vand.u32 2147483647, %v531
        %vm643 = vcmp.le.f32.partialorder %v642, 0.7853982
        %vm644 = vcmp.lt.s32.totalorder %v531, 0
        %v645 = vand.u32 %v531, 2139095040
        %v646 = vshrl.u32 %v645, 23
        %v647 = vsub.s32 %v646, 127
        %v648 = vand.u32 2147483647, %v531
        %v649 = vand.u32 %v648, 8388607
        %v650 = vor.u32 %v649, 8388608
        %v651 = vsub.s32 0, %v650
        %v652 = vadd.s32 %v647, 1
        %vm653 = vcmp.gt.s32.totalorder %v652, 0
        %v654 = vsel %vm653, %v652, 0
        %v655 = vshrl.u32 %v654, 5
        %v656 = vand.u32 %v654, 31
        %v657 = vsub.s32 32, %v656
        %v658 = vshrl.u32 683565275, %v657
        %v659 = vshll.u32 683565275, %v656
        %v660 = vshrl.u32 2475754826, %v657
        %v661 = vor.u32 %v659, %v660
        %v662 = vshll.u32 2475754826, %v656
        %v663 = vshrl.u32 2131351028, %v657
        %v664 = vor.u32 %v662, %v663
        %v665 = vshll.u32 2131351028, %v656
        %v666 = vshrl.u32 2102212464, %v657
        %v667 = vor.u32 %v665, %v666
        %v668 = vshll.u32 2102212464, %v656
        %v669 = vshrl.u32 920167782, %v657
        %v670 = vor.u32 %v668, %v669
        %v671 = vshll.u32 920167782, %v656
        %v672 = vshrl.u32 1326507024, %v657
        %v673 = vor.u32 %v671, %v672
        %vm674 = vcmp.lt.s32.totalorder %v655, 1
        %vm675 = vcmp.lt.s32.totalorder %v655, 2
        %vm676 = vcmp.lt.s32.totalorder %v655, 3
        %vm677 = vcmp.lt.s32.totalorder %v655, 4
        %v678 = vsel %vm674, %v658, %v661
        %v679 = vsel %vm677, %v667, 2102212464
        %v680 = vsel %vm676, %v664, %v679
        %v681 = vsel %vm675, %v678, %v680
        %v682 = vsel %vm674, %v661, %v664
        %v683 = vsel %vm677, %v670, 920167782
        %v684 = vsel %vm676, %v667, %v683
        %v685 = vsel %vm675, %v682, %v684
        %v686 = vsel %vm674, %v664, %v667
        %v687 = vsel %vm677, %v673, 1326507024
        %v688 = vsel %vm676, %v670, %v687
        %v689 = vsel %vm675, %v686, %v688
        %v690 = vshll.u32 %v650, 8
        %v691 = vmul.u32.u64.compose %v690, %v689
        %v692 = vextract.low.u32 %v691
        %v693 = vextract.high.u32 %v691
        %v694 = vmul.u32.u64.compose %v690, %v685
        %v695 = vextract.low.u32 %v694
        %v696 = vextract.high.u32 %v694
        %v697 = vmul.u32 %v690, %v681
        %v698 = vadd.s32 %v693, %v695
        %vm699 = vc.u32 %v693, %v695
        %v700 = vadd.s32 %v696, 1
        %v701 = vsel %vm699, %v700, %v696
        %v702 = vadd.s32 %v697, %v701
        %v703 = vadd.s32 %v702, 536870912
        %v704 = vshrl.u32 %v703, 30
        %v705 = vshll.u32 %v704, 30
        %v706 = vsub.s32 %v702, %v705
        %vm707 = vcmp.lt.s32.totalorder %v706, 0
        %v708 = vsub.s32 0, %v706
        %v709 = vsel %vm707, %v708, %v706
        %v710 = vclz %v709
        %v711 = vsub.s32 %v710, 2
        %vm712 = vcmp.gt.s32.totalorder 0, %v711
        %v713 = vsel %vm712, 0, %v711
        %v714 = vsub.s32 32, %v713
        %v715 = vshll.u32 %v706, %v713
        %v716 = vshrl.u32 %v698, %v714
        %v717 = vor.u32 %v715, %v716
        %v718 = vsub.s32 4294967266, %v713
        %v719 = vadd.s32 %v718, 127
        %v720 = vshll.u32 %v719, 23
        %v721 = vor.u32 4788187, %v720
        %v722 = vand.u32 2147483647, %v721
        %v724 = vcvt.s32.f32 %v717
        %v725 = vmul.f32 %v724, %v722
        %v726 = vxor.u32 %v725, 2147483648
        %v727 = vsel %vm644, %v726, %v725
        %v728 = vsub.s32 4, %v704
        %v729 = vsel %vm644, %v728, %v704
        %v730 = vsel %vm643, %v531, %v727
        %v731 = vsel %vm643, 0, %v729
        %v732 = vcosq.f32.pop %v730
        %v733 = vsinq.f32.pop %v730
        %vm734 = vweird.f32 %v531
        %v735 = vadd.s32 %v731, 3
        %v736 = vand.u32 %v735, 3
        %vm737 = vcmp.lt.s32.totalorder %v736, 2
        %vm738 = vcmp.eq.s32.totalorder %v736, 0
        %v739 = vxor.u32 %v733, 2147483648
        %v740 = vsel %vm738, %v732, %v739
        %vm741 = vcmp.eq.s32.totalorder %v736, 2
        %v742 = vxor.u32 %v732, 2147483648
        %v743 = vsel %vm741, %v742, %v733
        %v744 = vsel %vm737, %v740, %v743
        %v745 = vsel %vm734, nan, %v744
        %v746 = vand.u32 2147483647, %v532
        %vm747 = vcmp.le.f32.partialorder %v746, 0.7853982
        %vm748 = vcmp.lt.s32.totalorder %v532, 0
        %v749 = vand.u32 %v532, 2139095040
        %v750 = vshrl.u32 %v749, 23
        %v751 = vsub.s32 %v750, 127
        %v752 = vand.u32 2147483647, %v532
        %v753 = vand.u32 %v752, 8388607
        %v754 = vor.u32 %v753, 8388608
        %v755 = vsub.s32 0, %v754
        %v756 = vadd.s32 %v751, 1
        %vm757 = vcmp.gt.s32.totalorder %v756, 0
        %v758 = vsel %vm757, %v756, 0
        %v759 = vshrl.u32 %v758, 5
        %v760 = vand.u32 %v758, 31
        %v761 = vsub.s32 32, %v760
        %v762 = vshrl.u32 683565275, %v761
        %v763 = vshll.u32 683565275, %v760
        %v764 = vshrl.u32 2475754826, %v761
        %v765 = vor.u32 %v763, %v764
        %v766 = vshll.u32 2475754826, %v760
        %v767 = vshrl.u32 2131351028, %v761
        %v768 = vor.u32 %v766, %v767
        %v769 = vshll.u32 2131351028, %v760
        %v770 = vshrl.u32 2102212464, %v761
        %v771 = vor.u32 %v769, %v770
        %v772 = vshll.u32 2102212464, %v760
        %v773 = vshrl.u32 920167782, %v761
        %v774 = vor.u32 %v772, %v773
        %v775 = vshll.u32 920167782, %v760
        %v776 = vshrl.u32 1326507024, %v761
        %v777 = vor.u32 %v775, %v776
        %vm778 = vcmp.lt.s32.totalorder %v759, 1
        %vm779 = vcmp.lt.s32.totalorder %v759, 2
        %vm780 = vcmp.lt.s32.totalorder %v759, 3
        %vm781 = vcmp.lt.s32.totalorder %v759, 4
        %v782 = vsel %vm778, %v762, %v765
        %v783 = vsel %vm781, %v771, 2102212464
        %v784 = vsel %vm780, %v768, %v783
        %v785 = vsel %vm779, %v782, %v784
        %v786 = vsel %vm778, %v765, %v768
        %v787 = vsel %vm781, %v774, 920167782
        %v788 = vsel %vm780, %v771, %v787
        %v789 = vsel %vm779, %v786, %v788
        %v790 = vsel %vm778, %v768, %v771
        %v791 = vsel %vm781, %v777, 1326507024
        %v792 = vsel %vm780, %v774, %v791
        %v793 = vsel %vm779, %v790, %v792
        %v794 = vshll.u32 %v754, 8
        %v795 = vmul.u32.u64.compose %v794, %v793
        %v796 = vextract.low.u32 %v795
        %v797 = vextract.high.u32 %v795
        %v798 = vmul.u32.u64.compose %v794, %v789
        %v799 = vextract.low.u32 %v798
        %v800 = vextract.high.u32 %v798
        %v801 = vmul.u32 %v794, %v785
        %v802 = vadd.s32 %v797, %v799
        %vm803 = vc.u32 %v797, %v799
        %v804 = vadd.s32 %v800, 1
        %v805 = vsel %vm803, %v804, %v800
        %v806 = vadd.s32 %v801, %v805
        %v807 = vadd.s32 %v806, 536870912
        %v808 = vshrl.u32 %v807, 30
        %v809 = vshll.u32 %v808, 30
        %v810 = vsub.s32 %v806, %v809
        %vm811 = vcmp.lt.s32.totalorder %v810, 0
        %v812 = vsub.s32 0, %v810
        %v813 = vsel %vm811, %v812, %v810
        %v814 = vclz %v813
        %v815 = vsub.s32 %v814, 2
        %vm816 = vcmp.gt.s32.totalorder 0, %v815
        %v817 = vsel %vm816, 0, %v815
        %v818 = vsub.s32 32, %v817
        %v819 = vshll.u32 %v810, %v817
        %v820 = vshrl.u32 %v802, %v818
        %v821 = vor.u32 %v819, %v820
        %v822 = vsub.s32 4294967266, %v817
        %v823 = vadd.s32 %v822, 127
        %v824 = vshll.u32 %v823, 23
        %v825 = vor.u32 4788187, %v824
        %v826 = vand.u32 2147483647, %v825
        %v828 = vcvt.s32.f32 %v821
        %v829 = vmul.f32 %v828, %v826
        %v830 = vxor.u32 %v829, 2147483648
        %v831 = vsel %vm748, %v830, %v829
        %v832 = vsub.s32 4, %v808
        %v833 = vsel %vm748, %v832, %v808
        %v834 = vsel %vm747, %v532, %v831
        %v835 = vsel %vm747, 0, %v833
        %v836 = vcosq.f32.pop %v834
        %v837 = vsinq.f32.pop %v834
        %vm838 = vweird.f32 %v532
        %v839 = vadd.s32 %v835, 3
        %v840 = vand.u32 %v839, 3
        %vm841 = vcmp.lt.s32.totalorder %v840, 2
        %vm842 = vcmp.eq.s32.totalorder %v840, 0
        %v843 = vxor.u32 %v837, 2147483648
        %v844 = vsel %vm842, %v836, %v843
        %vm845 = vcmp.eq.s32.totalorder %v840, 2
        %v846 = vxor.u32 %v836, 2147483648
        %v847 = vsel %vm845, %v846, %v837
        %v848 = vsel %vm841, %v844, %v847
        %v849 = vsel %vm838, nan, %v848
        %v850 = vand.u32 2147483647, %v533
        %vm851 = vcmp.le.f32.partialorder %v850, 0.7853982
        %vm852 = vcmp.lt.s32.totalorder %v533, 0
        %v853 = vand.u32 %v533, 2139095040
        %v854 = vshrl.u32 %v853, 23
        %v855 = vsub.s32 %v854, 127
        %v856 = vand.u32 2147483647, %v533
        %v857 = vand.u32 %v856, 8388607
        %v858 = vor.u32 %v857, 8388608
        %v859 = vsub.s32 0, %v858
        %v860 = vadd.s32 %v855, 1
        %vm861 = vcmp.gt.s32.totalorder %v860, 0
        %v862 = vsel %vm861, %v860, 0
        %v863 = vshrl.u32 %v862, 5
        %v864 = vand.u32 %v862, 31
        %v865 = vsub.s32 32, %v864
        %v866 = vshrl.u32 683565275, %v865
        %v867 = vshll.u32 683565275, %v864
        %v868 = vshrl.u32 2475754826, %v865
        %v869 = vor.u32 %v867, %v868
        %v870 = vshll.u32 2475754826, %v864
        %v871 = vshrl.u32 2131351028, %v865
        %v872 = vor.u32 %v870, %v871
        %v873 = vshll.u32 2131351028, %v864
        %v874 = vshrl.u32 2102212464, %v865
        %v875 = vor.u32 %v873, %v874
        %v876 = vshll.u32 2102212464, %v864
        %v877 = vshrl.u32 920167782, %v865
        %v878 = vor.u32 %v876, %v877
        %v879 = vshll.u32 920167782, %v864
        %v880 = vshrl.u32 1326507024, %v865
        %v881 = vor.u32 %v879, %v880
        %vm882 = vcmp.lt.s32.totalorder %v863, 1
        %vm883 = vcmp.lt.s32.totalorder %v863, 2
        %vm884 = vcmp.lt.s32.totalorder %v863, 3
        %vm885 = vcmp.lt.s32.totalorder %v863, 4
        %v886 = vsel %vm882, %v866, %v869
        %v887 = vsel %vm885, %v875, 2102212464
        %v888 = vsel %vm884, %v872, %v887
        %v889 = vsel %vm883, %v886, %v888
        %v890 = vsel %vm882, %v869, %v872
        %v891 = vsel %vm885, %v878, 920167782
        %v892 = vsel %vm884, %v875, %v891
        %v893 = vsel %vm883, %v890, %v892
        %v894 = vsel %vm882, %v872, %v875
        %v895 = vsel %vm885, %v881, 1326507024
        %v896 = vsel %vm884, %v878, %v895
        %v897 = vsel %vm883, %v894, %v896
        %v898 = vshll.u32 %v858, 8
        %v899 = vmul.u32.u64.compose %v898, %v897
        %v900 = vextract.low.u32 %v899
        %v901 = vextract.high.u32 %v899
        %v902 = vmul.u32.u64.compose %v898, %v893
        %v903 = vextract.low.u32 %v902
        %v904 = vextract.high.u32 %v902
        %v905 = vmul.u32 %v898, %v889
        %v906 = vadd.s32 %v901, %v903
        %vm907 = vc.u32 %v901, %v903
        %v908 = vadd.s32 %v904, 1
        %v909 = vsel %vm907, %v908, %v904
        %v910 = vadd.s32 %v905, %v909
        %v911 = vadd.s32 %v910, 536870912
        %v912 = vshrl.u32 %v911, 30
        %v913 = vshll.u32 %v912, 30
        %v914 = vsub.s32 %v910, %v913
        %vm915 = vcmp.lt.s32.totalorder %v914, 0
        %v916 = vsub.s32 0, %v914
        %v917 = vsel %vm915, %v916, %v914
        %v918 = vclz %v917
        %v919 = vsub.s32 %v918, 2
        %vm920 = vcmp.gt.s32.totalorder 0, %v919
        %v921 = vsel %vm920, 0, %v919
        %v922 = vsub.s32 32, %v921
        %v923 = vshll.u32 %v914, %v921
        %v924 = vshrl.u32 %v906, %v922
        %v925 = vor.u32 %v923, %v924
        %v926 = vsub.s32 4294967266, %v921
        %v927 = vadd.s32 %v926, 127
        %v928 = vshll.u32 %v927, 23
        %v929 = vor.u32 4788187, %v928
        %v930 = vand.u32 2147483647, %v929
        %v932 = vcvt.s32.f32 %v925
        %v933 = vmul.f32 %v932, %v930
        %v934 = vxor.u32 %v933, 2147483648
        %v935 = vsel %vm852, %v934, %v933
        %v936 = vsub.s32 4, %v912
        %v937 = vsel %vm852, %v936, %v912
        %v938 = vsel %vm851, %v533, %v935
        %v939 = vsel %vm851, 0, %v937
        %v940 = vcosq.f32.pop %v938
        %v941 = vsinq.f32.pop %v938
        %vm942 = vweird.f32 %v533
        %v943 = vadd.s32 %v939, 3
        %v944 = vand.u32 %v943, 3
        %vm945 = vcmp.lt.s32.totalorder %v944, 2
        %vm946 = vcmp.eq.s32.totalorder %v944, 0
        %v947 = vxor.u32 %v941, 2147483648
        %v948 = vsel %vm946, %v940, %v947
        %vm949 = vcmp.eq.s32.totalorder %v944, 2
        %v950 = vxor.u32 %v940, 2147483648
        %v951 = vsel %vm949, %v950, %v941
        %v952 = vsel %vm945, %v948, %v951
        %v953 = vsel %vm942, nan, %v952
        %v954 = vand.u32 2147483647, %v534
        %vm955 = vcmp.le.f32.partialorder %v954, 0.7853982
        %vm956 = vcmp.lt.s32.totalorder %v534, 0
        %v957 = vand.u32 %v534, 2139095040
        %v958 = vshrl.u32 %v957, 23
        %v959 = vsub.s32 %v958, 127
        %v960 = vand.u32 2147483647, %v534
        %v961 = vand.u32 %v960, 8388607
        %v962 = vor.u32 %v961, 8388608
        %v963 = vsub.s32 0, %v962
        %v964 = vadd.s32 %v959, 1
        %vm965 = vcmp.gt.s32.totalorder %v964, 0
        %v966 = vsel %vm965, %v964, 0
        %v967 = vshrl.u32 %v966, 5
        %v968 = vand.u32 %v966, 31
        %v969 = vsub.s32 32, %v968
        %v970 = vshrl.u32 683565275, %v969
        %v971 = vshll.u32 683565275, %v968
        %v972 = vshrl.u32 2475754826, %v969
        %v973 = vor.u32 %v971, %v972
        %v974 = vshll.u32 2475754826, %v968
        %v975 = vshrl.u32 2131351028, %v969
        %v976 = vor.u32 %v974, %v975
        %v977 = vshll.u32 2131351028, %v968
        %v978 = vshrl.u32 2102212464, %v969
        %v979 = vor.u32 %v977, %v978
        %v980 = vshll.u32 2102212464, %v968
        %v981 = vshrl.u32 920167782, %v969
        %v982 = vor.u32 %v980, %v981
        %v983 = vshll.u32 920167782, %v968
        %v984 = vshrl.u32 1326507024, %v969
        %v985 = vor.u32 %v983, %v984
        %vm986 = vcmp.lt.s32.totalorder %v967, 1
        %vm987 = vcmp.lt.s32.totalorder %v967, 2
        %vm988 = vcmp.lt.s32.totalorder %v967, 3
        %vm989 = vcmp.lt.s32.totalorder %v967, 4
        %v990 = vsel %vm986, %v970, %v973
        %v991 = vsel %vm989, %v979, 2102212464
        %v992 = vsel %vm988, %v976, %v991
        %v993 = vsel %vm987, %v990, %v992
        %v994 = vsel %vm986, %v973, %v976
        %v995 = vsel %vm989, %v982, 920167782
        %v996 = vsel %vm988, %v979, %v995
        %v997 = vsel %vm987, %v994, %v996
        %v998 = vsel %vm986, %v976, %v979
        %v999 = vsel %vm989, %v985, 1326507024
        %v1000 = vsel %vm988, %v982, %v999
        %v1001 = vsel %vm987, %v998, %v1000
        %v1002 = vshll.u32 %v962, 8
        %v1003 = vmul.u32.u64.compose %v1002, %v1001
        %v1004 = vextract.low.u32 %v1003
        %v1005 = vextract.high.u32 %v1003
        %v1006 = vmul.u32.u64.compose %v1002, %v997
        %v1007 = vextract.low.u32 %v1006
        %v1008 = vextract.high.u32 %v1006
        %v1009 = vmul.u32 %v1002, %v993
        %v1010 = vadd.s32 %v1005, %v1007
        %vm1011 = vc.u32 %v1005, %v1007
        %v1012 = vadd.s32 %v1008, 1
        %v1013 = vsel %vm1011, %v1012, %v1008
        %v1014 = vadd.s32 %v1009, %v1013
        %v1015 = vadd.s32 %v1014, 536870912
        %v1016 = vshrl.u32 %v1015, 30
        %v1017 = vshll.u32 %v1016, 30
        %v1018 = vsub.s32 %v1014, %v1017
        %vm1019 = vcmp.lt.s32.totalorder %v1018, 0
        %v1020 = vsub.s32 0, %v1018
        %v1021 = vsel %vm1019, %v1020, %v1018
        %v1022 = vclz %v1021
        %v1023 = vsub.s32 %v1022, 2
        %vm1024 = vcmp.gt.s32.totalorder 0, %v1023
        %v1025 = vsel %vm1024, 0, %v1023
        %v1026 = vsub.s32 32, %v1025
        %v1027 = vshll.u32 %v1018, %v1025
        %v1028 = vshrl.u32 %v1010, %v1026
        %v1029 = vor.u32 %v1027, %v1028
        %v1030 = vsub.s32 4294967266, %v1025
        %v1031 = vadd.s32 %v1030, 127
        %v1032 = vshll.u32 %v1031, 23
        %v1033 = vor.u32 4788187, %v1032
        %v1034 = vand.u32 2147483647, %v1033
        %v1036 = vcvt.s32.f32 %v1029
        %v1037 = vmul.f32 %v1036, %v1034
        %v1038 = vxor.u32 %v1037, 2147483648
        %v1039 = vsel %vm956, %v1038, %v1037
        %v1040 = vsub.s32 4, %v1016
        %v1041 = vsel %vm956, %v1040, %v1016
        %v1042 = vsel %vm955, %v534, %v1039
        %v1043 = vsel %vm955, 0, %v1041
        %v1044 = vcosq.f32.pop %v1042
        %v1045 = vsinq.f32.pop %v1042
        %vm1046 = vweird.f32 %v534
        %v1047 = vadd.s32 %v1043, 3
        %v1048 = vand.u32 %v1047, 3
        %vm1049 = vcmp.lt.s32.totalorder %v1048, 2
        %vm1050 = vcmp.eq.s32.totalorder %v1048, 0
        %v1051 = vxor.u32 %v1045, 2147483648
        %v1052 = vsel %vm1050, %v1044, %v1051
        %vm1053 = vcmp.eq.s32.totalorder %v1048, 2
        %v1054 = vxor.u32 %v1044, 2147483648
        %v1055 = vsel %vm1053, %v1054, %v1045
        %v1056 = vsel %vm1049, %v1052, %v1055
        %v1057 = vsel %vm1046, nan, %v1056
        %v1058 = vand.u32 2147483647, %v535
        %vm1059 = vcmp.le.f32.partialorder %v1058, 0.7853982
        %vm1060 = vcmp.lt.s32.totalorder %v535, 0
        %v1061 = vand.u32 %v535, 2139095040
        %v1062 = vshrl.u32 %v1061, 23
        %v1063 = vsub.s32 %v1062, 127
        %v1064 = vand.u32 2147483647, %v535
        %v1065 = vand.u32 %v1064, 8388607
        %v1066 = vor.u32 %v1065, 8388608
        %v1067 = vsub.s32 0, %v1066
        %v1068 = vadd.s32 %v1063, 1
        %vm1069 = vcmp.gt.s32.totalorder %v1068, 0
        %v1070 = vsel %vm1069, %v1068, 0
        %v1071 = vshrl.u32 %v1070, 5
        %v1072 = vand.u32 %v1070, 31
        %v1073 = vsub.s32 32, %v1072
        %v1074 = vshrl.u32 683565275, %v1073
        %v1075 = vshll.u32 683565275, %v1072
        %v1076 = vshrl.u32 2475754826, %v1073
        %v1077 = vor.u32 %v1075, %v1076
        %v1078 = vshll.u32 2475754826, %v1072
        %v1079 = vshrl.u32 2131351028, %v1073
        %v1080 = vor.u32 %v1078, %v1079
        %v1081 = vshll.u32 2131351028, %v1072
        %v1082 = vshrl.u32 2102212464, %v1073
        %v1083 = vor.u32 %v1081, %v1082
        %v1084 = vshll.u32 2102212464, %v1072
        %v1085 = vshrl.u32 920167782, %v1073
        %v1086 = vor.u32 %v1084, %v1085
        %v1087 = vshll.u32 920167782, %v1072
        %v1088 = vshrl.u32 1326507024, %v1073
        %v1089 = vor.u32 %v1087, %v1088
        %vm1090 = vcmp.lt.s32.totalorder %v1071, 1
        %vm1091 = vcmp.lt.s32.totalorder %v1071, 2
        %vm1092 = vcmp.lt.s32.totalorder %v1071, 3
        %vm1093 = vcmp.lt.s32.totalorder %v1071, 4
        %v1094 = vsel %vm1090, %v1074, %v1077
        %v1095 = vsel %vm1093, %v1083, 2102212464
        %v1096 = vsel %vm1092, %v1080, %v1095
        %v1097 = vsel %vm1091, %v1094, %v1096
        %v1098 = vsel %vm1090, %v1077, %v1080
        %v1099 = vsel %vm1093, %v1086, 920167782
        %v1100 = vsel %vm1092, %v1083, %v1099
        %v1101 = vsel %vm1091, %v1098, %v1100
        %v1102 = vsel %vm1090, %v1080, %v1083
        %v1103 = vsel %vm1093, %v1089, 1326507024
        %v1104 = vsel %vm1092, %v1086, %v1103
        %v1105 = vsel %vm1091, %v1102, %v1104
        %v1106 = vshll.u32 %v1066, 8
        %v1107 = vmul.u32.u64.compose %v1106, %v1105
        %v1108 = vextract.low.u32 %v1107
        %v1109 = vextract.high.u32 %v1107
        %v1110 = vmul.u32.u64.compose %v1106, %v1101
        %v1111 = vextract.low.u32 %v1110
        %v1112 = vextract.high.u32 %v1110
        %v1113 = vmul.u32 %v1106, %v1097
        %v1114 = vadd.s32 %v1109, %v1111
        %vm1115 = vc.u32 %v1109, %v1111
        %v1116 = vadd.s32 %v1112, 1
        %v1117 = vsel %vm1115, %v1116, %v1112
        %v1118 = vadd.s32 %v1113, %v1117
        %v1119 = vadd.s32 %v1118, 536870912
        %v1120 = vshrl.u32 %v1119, 30
        %v1121 = vshll.u32 %v1120, 30
        %v1122 = vsub.s32 %v1118, %v1121
        %vm1123 = vcmp.lt.s32.totalorder %v1122, 0
        %v1124 = vsub.s32 0, %v1122
        %v1125 = vsel %vm1123, %v1124, %v1122
        %v1126 = vclz %v1125
        %v1127 = vsub.s32 %v1126, 2
        %vm1128 = vcmp.gt.s32.totalorder 0, %v1127
        %v1129 = vsel %vm1128, 0, %v1127
        %v1130 = vsub.s32 32, %v1129
        %v1131 = vshll.u32 %v1122, %v1129
        %v1132 = vshrl.u32 %v1114, %v1130
        %v1133 = vor.u32 %v1131, %v1132
        %v1134 = vsub.s32 4294967266, %v1129
        %v1135 = vadd.s32 %v1134, 127
        %v1136 = vshll.u32 %v1135, 23
        %v1137 = vor.u32 4788187, %v1136
        %v1138 = vand.u32 2147483647, %v1137
        %v1140 = vcvt.s32.f32 %v1133
        %v1141 = vmul.f32 %v1140, %v1138
        %v1142 = vxor.u32 %v1141, 2147483648
        %v1143 = vsel %vm1060, %v1142, %v1141
        %v1144 = vsub.s32 4, %v1120
        %v1145 = vsel %vm1060, %v1144, %v1120
        %v1146 = vsel %vm1059, %v535, %v1143
        %v1147 = vsel %vm1059, 0, %v1145
        %v1148 = vcosq.f32.pop %v1146
        %v1149 = vsinq.f32.pop %v1146
        %vm1150 = vweird.f32 %v535
        %v1151 = vadd.s32 %v1147, 3
        %v1152 = vand.u32 %v1151, 3
        %vm1153 = vcmp.lt.s32.totalorder %v1152, 2
        %vm1154 = vcmp.eq.s32.totalorder %v1152, 0
        %v1155 = vxor.u32 %v1149, 2147483648
        %v1156 = vsel %vm1154, %v1148, %v1155
        %vm1157 = vcmp.eq.s32.totalorder %v1152, 2
        %v1158 = vxor.u32 %v1148, 2147483648
        %v1159 = vsel %vm1157, %v1158, %v1149
        %v1160 = vsel %vm1153, %v1156, %v1159
        %v1161 = vsel %vm1150, nan, %v1160
        %v1162 = vand.u32 2147483647, %v536
        %vm1163 = vcmp.le.f32.partialorder %v1162, 0.7853982
        %vm1164 = vcmp.lt.s32.totalorder %v536, 0
        %v1165 = vand.u32 %v536, 2139095040
        %v1166 = vshrl.u32 %v1165, 23
        %v1167 = vsub.s32 %v1166, 127
        %v1168 = vand.u32 2147483647, %v536
        %v1169 = vand.u32 %v1168, 8388607
        %v1170 = vor.u32 %v1169, 8388608
        %v1171 = vsub.s32 0, %v1170
        %v1172 = vadd.s32 %v1167, 1
        %vm1173 = vcmp.gt.s32.totalorder %v1172, 0
        %v1174 = vsel %vm1173, %v1172, 0
        %v1175 = vshrl.u32 %v1174, 5
        %v1176 = vand.u32 %v1174, 31
        %v1177 = vsub.s32 32, %v1176
        %v1178 = vshrl.u32 683565275, %v1177
        %v1179 = vshll.u32 683565275, %v1176
        %v1180 = vshrl.u32 2475754826, %v1177
        %v1181 = vor.u32 %v1179, %v1180
        %v1182 = vshll.u32 2475754826, %v1176
        %v1183 = vshrl.u32 2131351028, %v1177
        %v1184 = vor.u32 %v1182, %v1183
        %v1185 = vshll.u32 2131351028, %v1176
        %v1186 = vshrl.u32 2102212464, %v1177
        %v1187 = vor.u32 %v1185, %v1186
        %v1188 = vshll.u32 2102212464, %v1176
        %v1189 = vshrl.u32 920167782, %v1177
        %v1190 = vor.u32 %v1188, %v1189
        %v1191 = vshll.u32 920167782, %v1176
        %v1192 = vshrl.u32 1326507024, %v1177
        %v1193 = vor.u32 %v1191, %v1192
        %vm1194 = vcmp.lt.s32.totalorder %v1175, 1
        %vm1195 = vcmp.lt.s32.totalorder %v1175, 2
        %vm1196 = vcmp.lt.s32.totalorder %v1175, 3
        %vm1197 = vcmp.lt.s32.totalorder %v1175, 4
        %v1198 = vsel %vm1194, %v1178, %v1181
        %v1199 = vsel %vm1197, %v1187, 2102212464
        %v1200 = vsel %vm1196, %v1184, %v1199
        %v1201 = vsel %vm1195, %v1198, %v1200
        %v1202 = vsel %vm1194, %v1181, %v1184
        %v1203 = vsel %vm1197, %v1190, 920167782
        %v1204 = vsel %vm1196, %v1187, %v1203
        %v1205 = vsel %vm1195, %v1202, %v1204
        %v1206 = vsel %vm1194, %v1184, %v1187
        %v1207 = vsel %vm1197, %v1193, 1326507024
        %v1208 = vsel %vm1196, %v1190, %v1207
        %v1209 = vsel %vm1195, %v1206, %v1208
        %v1210 = vshll.u32 %v1170, 8
        %v1211 = vmul.u32.u64.compose %v1210, %v1209
        %v1212 = vextract.low.u32 %v1211
        %v1213 = vextract.high.u32 %v1211
        %v1214 = vmul.u32.u64.compose %v1210, %v1205
        %v1215 = vextract.low.u32 %v1214
        %v1216 = vextract.high.u32 %v1214
        %v1217 = vmul.u32 %v1210, %v1201
        %v1218 = vadd.s32 %v1213, %v1215
        %vm1219 = vc.u32 %v1213, %v1215
        %v1220 = vadd.s32 %v1216, 1
        %v1221 = vsel %vm1219, %v1220, %v1216
        %v1222 = vadd.s32 %v1217, %v1221
        %v1223 = vadd.s32 %v1222, 536870912
        %v1224 = vshrl.u32 %v1223, 30
        %v1225 = vshll.u32 %v1224, 30
        %v1226 = vsub.s32 %v1222, %v1225
        %vm1227 = vcmp.lt.s32.totalorder %v1226, 0
        %v1228 = vsub.s32 0, %v1226
        %v1229 = vsel %vm1227, %v1228, %v1226
        %v1230 = vclz %v1229
        %v1231 = vsub.s32 %v1230, 2
        %vm1232 = vcmp.gt.s32.totalorder 0, %v1231
        %v1233 = vsel %vm1232, 0, %v1231
        %v1234 = vsub.s32 32, %v1233
        %v1235 = vshll.u32 %v1226, %v1233
        %v1236 = vshrl.u32 %v1218, %v1234
        %v1237 = vor.u32 %v1235, %v1236
        %v1238 = vsub.s32 4294967266, %v1233
        %v1239 = vadd.s32 %v1238, 127
        %v1240 = vshll.u32 %v1239, 23
        %v1241 = vor.u32 4788187, %v1240
        %v1242 = vand.u32 2147483647, %v1241
        %v1244 = vcvt.s32.f32 %v1237
        %v1245 = vmul.f32 %v1244, %v1242
        %v1246 = vxor.u32 %v1245, 2147483648
        %v1247 = vsel %vm1164, %v1246, %v1245
        %v1248 = vsub.s32 4, %v1224
        %v1249 = vsel %vm1164, %v1248, %v1224
        %v1250 = vsel %vm1163, %v536, %v1247
        %v1251 = vsel %vm1163, 0, %v1249
        %v1252 = vcosq.f32.pop %v1250
        %v1253 = vsinq.f32.pop %v1250
        %vm1254 = vweird.f32 %v536
        %v1255 = vadd.s32 %v1251, 3
        %v1256 = vand.u32 %v1255, 3
        %vm1257 = vcmp.lt.s32.totalorder %v1256, 2
        %vm1258 = vcmp.eq.s32.totalorder %v1256, 0
        %v1259 = vxor.u32 %v1253, 2147483648
        %v1260 = vsel %vm1258, %v1252, %v1259
        %vm1261 = vcmp.eq.s32.totalorder %v1256, 2
        %v1262 = vxor.u32 %v1252, 2147483648
        %v1263 = vsel %vm1261, %v1262, %v1253
        %v1264 = vsel %vm1257, %v1260, %v1263
        %v1265 = vsel %vm1254, nan, %v1264
        %v1266 = vand.u32 2147483647, %v537
        %vm1267 = vcmp.le.f32.partialorder %v1266, 0.7853982
        %vm1268 = vcmp.lt.s32.totalorder %v537, 0
        %v1269 = vand.u32 %v537, 2139095040
        %v1270 = vshrl.u32 %v1269, 23
        %v1271 = vsub.s32 %v1270, 127
        %v1272 = vand.u32 2147483647, %v537
        %v1273 = vand.u32 %v1272, 8388607
        %v1274 = vor.u32 %v1273, 8388608
        %v1275 = vsub.s32 0, %v1274
        %v1276 = vadd.s32 %v1271, 1
        %vm1277 = vcmp.gt.s32.totalorder %v1276, 0
        %v1278 = vsel %vm1277, %v1276, 0
        %v1279 = vshrl.u32 %v1278, 5
        %v1280 = vand.u32 %v1278, 31
        %v1281 = vsub.s32 32, %v1280
        %v1282 = vshrl.u32 683565275, %v1281
        %v1283 = vshll.u32 683565275, %v1280
        %v1284 = vshrl.u32 2475754826, %v1281
        %v1285 = vor.u32 %v1283, %v1284
        %v1286 = vshll.u32 2475754826, %v1280
        %v1287 = vshrl.u32 2131351028, %v1281
        %v1288 = vor.u32 %v1286, %v1287
        %v1289 = vshll.u32 2131351028, %v1280
        %v1290 = vshrl.u32 2102212464, %v1281
        %v1291 = vor.u32 %v1289, %v1290
        %v1292 = vshll.u32 2102212464, %v1280
        %v1293 = vshrl.u32 920167782, %v1281
        %v1294 = vor.u32 %v1292, %v1293
        %v1295 = vshll.u32 920167782, %v1280
        %v1296 = vshrl.u32 1326507024, %v1281
        %v1297 = vor.u32 %v1295, %v1296
        %vm1298 = vcmp.lt.s32.totalorder %v1279, 1
        %vm1299 = vcmp.lt.s32.totalorder %v1279, 2
        %vm1300 = vcmp.lt.s32.totalorder %v1279, 3
        %vm1301 = vcmp.lt.s32.totalorder %v1279, 4
        %v1302 = vsel %vm1298, %v1282, %v1285
        %v1303 = vsel %vm1301, %v1291, 2102212464
        %v1304 = vsel %vm1300, %v1288, %v1303
        %v1305 = vsel %vm1299, %v1302, %v1304
        %v1306 = vsel %vm1298, %v1285, %v1288
        %v1307 = vsel %vm1301, %v1294, 920167782
        %v1308 = vsel %vm1300, %v1291, %v1307
        %v1309 = vsel %vm1299, %v1306, %v1308
        %v1310 = vsel %vm1298, %v1288, %v1291
        %v1311 = vsel %vm1301, %v1297, 1326507024
        %v1312 = vsel %vm1300, %v1294, %v1311
        %v1313 = vsel %vm1299, %v1310, %v1312
        %v1314 = vshll.u32 %v1274, 8
        %v1315 = vmul.u32.u64.compose %v1314, %v1313
        %v1316 = vextract.low.u32 %v1315
        %v1317 = vextract.high.u32 %v1315
        %v1318 = vmul.u32.u64.compose %v1314, %v1309
        %v1319 = vextract.low.u32 %v1318
        %v1320 = vextract.high.u32 %v1318
        %v1321 = vmul.u32 %v1314, %v1305
        %v1322 = vadd.s32 %v1317, %v1319
        %vm1323 = vc.u32 %v1317, %v1319
        %v1324 = vadd.s32 %v1320, 1
        %v1325 = vsel %vm1323, %v1324, %v1320
        %v1326 = vadd.s32 %v1321, %v1325
        %v1327 = vadd.s32 %v1326, 536870912
        %v1328 = vshrl.u32 %v1327, 30
        %v1329 = vshll.u32 %v1328, 30
        %v1330 = vsub.s32 %v1326, %v1329
        %vm1331 = vcmp.lt.s32.totalorder %v1330, 0
        %v1332 = vsub.s32 0, %v1330
        %v1333 = vsel %vm1331, %v1332, %v1330
        %v1334 = vclz %v1333
        %v1335 = vsub.s32 %v1334, 2
        %vm1336 = vcmp.gt.s32.totalorder 0, %v1335
        %v1337 = vsel %vm1336, 0, %v1335
        %v1338 = vsub.s32 32, %v1337
        %v1339 = vshll.u32 %v1330, %v1337
        %v1340 = vshrl.u32 %v1322, %v1338
        %v1341 = vor.u32 %v1339, %v1340
        %v1342 = vsub.s32 4294967266, %v1337
        %v1343 = vadd.s32 %v1342, 127
        %v1344 = vshll.u32 %v1343, 23
        %v1345 = vor.u32 4788187, %v1344
        %v1346 = vand.u32 2147483647, %v1345
        %v1348 = vcvt.s32.f32 %v1341
        %v1349 = vmul.f32 %v1348, %v1346
        %v1350 = vxor.u32 %v1349, 2147483648
        %v1351 = vsel %vm1268, %v1350, %v1349
        %v1352 = vsub.s32 4, %v1328
        %v1353 = vsel %vm1268, %v1352, %v1328
        %v1354 = vsel %vm1267, %v537, %v1351
        %v1355 = vsel %vm1267, 0, %v1353
        %v1356 = vcosq.f32.pop %v1354
        %v1357 = vsinq.f32.pop %v1354
        %vm1358 = vweird.f32 %v537
        %v1359 = vadd.s32 %v1355, 3
        %v1360 = vand.u32 %v1359, 3
        %vm1361 = vcmp.lt.s32.totalorder %v1360, 2
        %vm1362 = vcmp.eq.s32.totalorder %v1360, 0
        %v1363 = vxor.u32 %v1357, 2147483648
        %v1364 = vsel %vm1362, %v1356, %v1363
        %vm1365 = vcmp.eq.s32.totalorder %v1360, 2
        %v1366 = vxor.u32 %v1356, 2147483648
        %v1367 = vsel %vm1365, %v1366, %v1357
        %v1368 = vsel %vm1361, %v1364, %v1367
        %v1369 = vsel %vm1358, nan, %v1368
        %1370 = vst [vmem:[%s274] sm:$0xff] %v641
        %1371 = vst [vmem:[%s274 + $0x8] sm:$0xff] %v745
        %1372 = vst [vmem:[%s274 + $0x10] sm:$0xff] %v849
        %1373 = vst [vmem:[%s274 + $0x18] sm:$0xff] %v953
        %1374 = vst [vmem:[%s274 + $0x20] sm:$0xff] %v1057
        %1375 = vst [vmem:[%s274 + $0x28] sm:$0xff] %v1161
        %1376 = vst [vmem:[%s274 + $0x30] sm:$0xff] %v1265
        %1377 = vst [vmem:[%s274 + $0x38] sm:$0xff] %v1369
        %s1378 = sand.u32 %s150, 1
        %s1379 = scalar_lea.sflag [#allocation4], %s1378
        %s1380 = sand.u32 %s150, 1
        %s1381 = smul.addr %s1380, 64
        %s1382 = scalar_lea.vmem [#allocation5], %s1381
        // Predicated region
        $region45: #{tpu_custom_call.1} parent=39 // pred_check
          %p1383 = pneg %p160
        $region46: #{tpu_custom_call.1} parent=39 // pred_check_branch
          %1385 = sbr.rel (%p1383) target = $region48
        $region47: #{tpu_custom_call.1} parent=39 // pred_region
          %s1386 = smul.u32 8, %s22
          %s1388 = ssub.s32 1024, 1024
          %1389 = vsyncadd %s1379, %s1388
          %s1390 = smul.addr %s1386, 128
          %s1391 = scalar_lea.hbm %s5, %s1390
          %s1392 = sshll.u32 %s1382, 4
          %s1393 = int_to_ptr.vmem [resolvable:$true] %s1392
          %1398 = dma.vmem_to_hbm [thread:$0]  %s1393, 1024, %s1391, %s1379, 128, 128, 8
        $region48: #{tpu_custom_call.1} parent=39 // pred_fallthru
          _
      $region40: #{tpu_custom_call.1} parent=5 // pred_fallthru
        _
      %p1399 = scmp.le.s32.totalorder 2, %s17
      // Predicated region
      $region49: #{tpu_custom_call.1} parent=5 // pred_check
        %p1400 = pneg %p1399
      $region50: #{tpu_custom_call.1} parent=5 // pred_check_branch
        %1402 = sbr.rel (%p1400) target = $region52
      $region51: #{tpu_custom_call.1} parent=5 // pred_region
        %s1403 = ssub.s32 %s17, 2
        // Predicated region
        $region53: #{tpu_custom_call.1} parent=51 // pred_check
          %p1404 = pneg %p166
        $region54: #{tpu_custom_call.1} parent=51 // pred_check_branch
          %1406 = sbr.rel (%p1404) target = $region56
        $region55: #{tpu_custom_call.1} parent=51 // pred_region
          %s1407 = sand.u32 %s151, 1
          %s1408 = scalar_lea.sflag [#allocation4], %s1407
          %s1409 = sand.u32 %s151, 1
          %s1410 = smul.addr %s1409, 64
          %s1411 = scalar_lea.vmem [#allocation5], %s1410
          %1412 = dma.done %s1408, 1024
        $region56: #{tpu_custom_call.1} parent=51 // pred_fallthru
          _
      $region52: #{tpu_custom_call.1} parent=5 // pred_fallthru
        _
    $region6: #{tpu_custom_call.1} parent=1 // loop_footer
      %s21 = sadd.s32 1, %s17
    $region7: #{tpu_custom_call.1} parent=1 // loop_footer_branch
      %16 = sbr.rel target = $region3
    $region8: #{tpu_custom_call.1} parent=1 // loop_exit
      _
    %1413 = vsyncpa [#allocation3], 1
    %s1414 = scalar_lea.sflag [#allocation3], 1
    %1415 = vsyncpa %s1414, 1
    %1416 = vsyncpa [#allocation4], 1
    %s1417 = scalar_lea.sflag [#allocation4], 1
    %1418 = vsyncpa %s1417, 1

</llo_original>
